<compile_context>
chip_gen: v5e
topology: v5e:2x2
jax: 0.10.0
libtpu: 0.0.40
codegen_flags: <defaults>
</compile_context>

<pallas_src>
import jax
import jax.numpy as jnp
from jax.experimental import pallas as pl
from jax.experimental.pallas import tpu as pltpu

# Logical layer sizes.
D_IN, D_H1, D_H2, D_H3, D_OUT = 350, 150, 50, 10, 3
# Lane-padded hidden sizes (multiples of 128).
P_H1, P_H2, P_H3 = 256, 128, 128

# Padded (rows, cols) of each resident weight / bias operand, in call order.
_PARAM_SHAPES = (
    (D_IN, P_H1), (1, P_H1),
    (P_H1, P_H2), (1, P_H2),
    (P_H2, P_H3), (1, P_H3),
    (P_H3, D_OUT), (1, D_OUT),
)


def _round_up(n, m):
    return ((n + m - 1) // m) * m


def _mlp_kernel(x_ref,
                w1_ref, b1_ref,
                w2_ref, b2_ref,
                w3_ref, b3_ref,
                w4_ref, b4_ref,
                o_ref):
    """One batch tile of the full forward pass; everything VMEM-resident."""
    cdt = w1_ref.dtype  # MXU input dtype (bf16 by default, f32 optional)
    # In-kernel cast: hidden under the MXU work; avoids a separate wrapper-side
    # XLA pass over x (which would read f32 + write bf16 before the kernel
    # reads it again).
    x = x_ref[...].astype(cdt)

    h = jnp.dot(x, w1_ref[...], preferred_element_type=jnp.float32) + b1_ref[...]
    h = jnp.maximum(h, 0.0)

    h = jnp.dot(h.astype(cdt), w2_ref[...],
                preferred_element_type=jnp.float32) + b2_ref[...]
    h = jnp.maximum(h, 0.0)

    h = jnp.dot(h.astype(cdt), w3_ref[...],
                preferred_element_type=jnp.float32) + b3_ref[...]
    h = jnp.maximum(h, 0.0)

    h = jnp.dot(h.astype(cdt), w4_ref[...],
                preferred_element_type=jnp.float32) + b4_ref[...]
    o_ref[...] = h.astype(o_ref.dtype)


def prepare_params(params, compute_dtype=jnp.bfloat16):
    """Zero-pad weights/biases to lane-friendly widths and cast the weights.

    Call ONCE at model-load time (hoisted out of the per-call hot path) and
    pass the returned tuple into xy_net_forward.
    """
    def pad2(a, rows, cols):
        return jnp.pad(a, ((0, rows - a.shape[0]), (0, cols - a.shape[1])))

    w1 = pad2(params["w1"], D_IN, P_H1).astype(compute_dtype)
    b1 = pad2(params["b1"], 1, P_H1).astype(jnp.float32)
    w2 = pad2(params["w2"], P_H1, P_H2).astype(compute_dtype)
    b2 = pad2(params["b2"], 1, P_H2).astype(jnp.float32)
    w3 = pad2(params["w3"], P_H2, P_H3).astype(compute_dtype)
    b3 = pad2(params["b3"], 1, P_H3).astype(jnp.float32)
    w4 = pad2(params["w4"], P_H3, D_OUT).astype(compute_dtype)
    b4 = pad2(params["b4"], 1, D_OUT).astype(jnp.float32)
    return (w1, b1, w2, b2, w3, b3, w4, b4)


def _auto_tile_and_vmem():
    """Per-generation batch-tile cap and explicit scoped-VMEM limit."""
    try:
        cap = int(pltpu.get_tpu_info().vmem_capacity_bytes)
    except Exception:
        cap = 64 << 20  # conservative: assume v7x-sized VMEM
    budget = min((cap * 3) // 4, 112 << 20)
    if budget >= (80 << 20):      # 128 MiB VMEM chips: v5e / v6e
        tile_cap = 8192
    elif budget >= (40 << 20):    # 64 MiB per TC: v7x
        tile_cap = 4096
    else:
        tile_cap = 2048
    return tile_cap, budget


def _build_forward(B, x_dtype, tile_b, vmem_limit_bytes, weight_bytes,
                   single_buffer_weights):
    grid = (pl.cdiv(B, tile_b),)

    def resident(shape):
        # Constant index_map => fetched once and reused every grid step.
        # Buffered(1) drops the useless second buffer for these operands,
        # freeing VMEM headroom for larger batch tiles.
        if single_buffer_weights:
            return pl.BlockSpec(shape, lambda i: (0, 0),
                                pipeline_mode=pl.Buffered(1))
        return pl.BlockSpec(shape, lambda i: (0, 0))

    cost = pl.CostEstimate(
        flops=2 * B * (D_IN * P_H1 + P_H1 * P_H2 + P_H2 * P_H3 + P_H3 * D_OUT),
        transcendentals=0,
        bytes_accessed=(B * D_IN * jnp.dtype(x_dtype).itemsize
                        + weight_bytes + B * D_OUT * 4),
    )

    return pl.pallas_call(
        _mlp_kernel,
        out_shape=jax.ShapeDtypeStruct((B, D_OUT), jnp.float32),
        grid=grid,
        in_specs=[pl.BlockSpec((tile_b, D_IN), lambda i: (i, 0))]  # x: batch-tiled
                 + [resident(s) for s in _PARAM_SHAPES],
        out_specs=pl.BlockSpec((tile_b, D_OUT), lambda i: (i, 0)),
        compiler_params=pltpu.CompilerParams(
            dimension_semantics=("parallel",),
            vmem_limit_bytes=int(vmem_limit_bytes)),
        cost_estimate=cost,
    )


def xy_net_forward(x, prepared_params, *, tile_b=None):
    """x: (B, 350) float32 (or bfloat16). Returns (B, 3) float32."""
    B, d_in = x.shape
    assert d_in == D_IN, d_in

    tile_cap, vmem_limit = _auto_tile_and_vmem()
    if tile_b is None:
        tile_b = tile_cap
    # Clamp to the (8-rounded) batch; block rows must stay a multiple of 8.
    tile_b = max(8, min(int(tile_b), _round_up(B, 8)))
    if B > 8:
        # Keep >= 2 grid steps so the "parallel" batch axis can shard across
        # both TensorCores on v7x (negligible cost on single-TC v5e/v6e).
        tile_b = min(tile_b, _round_up(pl.cdiv(B, 2), 8))

    weight_bytes = sum(int(a.size) * a.dtype.itemsize for a in prepared_params)

    last_err = None
    for single_buf in (True, False):
        try:
            fwd = _build_forward(B, x.dtype, tile_b, vmem_limit, weight_bytes,
                                 single_buffer_weights=single_buf)
            return fwd(x, *prepared_params)
        except Exception as e:  # pl.Buffered(1) unsupported -> default buffering
            last_err = e
    raise last_err


def init_params(key):
    """PyTorch nn.Linear-style init; weights stored (in, out), biases (1, out)."""
    sizes = [(D_IN, D_H1), (D_H1, D_H2), (D_H2, D_H3), (D_H3, D_OUT)]
    params = {}
    for idx, (fan_in, fan_out) in enumerate(sizes, start=1):
        key, kw, kb = jax.random.split(key, 3)
        bound = 1.0 / (fan_in ** 0.5)
        params[f"w{idx}"] = jax.random.uniform(
            kw, (fan_in, fan_out), jnp.float32, minval=-bound, maxval=bound)
        params[f"b{idx}"] = jax.random.uniform(
            kb, (1, fan_out), jnp.float32, minval=-bound, maxval=bound)
    return params


def _reference_forward(x, p, compute_dtype=jnp.float32):
    """Pure-JAX reference with the same cast pattern as the kernel."""
    def dense(h, w, b, relu):
        y = jnp.dot(h.astype(compute_dtype), w.astype(compute_dtype),
                    preferred_element_type=jnp.float32) + b
        return jnp.maximum(y, 0.0) if relu else y
    h = dense(x, p["w1"], p["b1"], True)
    h = dense(h, p["w2"], p["b2"], True)
    h = dense(h, p["w3"], p["b3"], True)
    return dense(h, p["w4"], p["b4"], False)


if __name__ == "__main__":
    key = jax.random.PRNGKey(0)
    key, kx = jax.random.split(key)
    params = init_params(key)

    # Hoisted out of the hot path: pad + cast weights once, reuse per call.
    prepared_f32 = prepare_params(params, jnp.float32)
    prepared_bf16 = prepare_params(params, jnp.bfloat16)

    # Small batch, f32 compute path — tight tolerance vs reference.
    B = 8
    x = jax.random.normal(kx, (B, D_IN), jnp.float32)
    out_f32 = jax.block_until_ready(xy_net_forward(x, prepared_f32))
    ref_f32 = _reference_forward(x, params, jnp.float32)
    assert out_f32.shape == (B, D_OUT), out_f32.shape
    assert jnp.allclose(out_f32, ref_f32, atol=1e-4, rtol=1e-4), "f32 mismatch"

    # Small batch, default bf16 compute path — compare against bf16 reference.
    out_bf16 = jax.block_until_ready(xy_net_forward(x, prepared_bf16))
    ref_bf16 = _reference_forward(x, params, jnp.bfloat16)
    assert out_bf16.shape == (B, D_OUT), out_bf16.shape
    assert jnp.allclose(out_bf16, ref_bf16, atol=1e-2, rtol=1e-2), "bf16 mismatch"

    # Larger batch: multiple grid steps plus a partial (masked) last block.
    key, kx2 = jax.random.split(key)
    x_big = jax.random.normal(kx2, (300, D_IN), jnp.float32)
    out_big = jax.block_until_ready(
        xy_net_forward(x_big, prepared_f32, tile_b=128))
    ref_big = _reference_forward(x_big, params, jnp.float32)
    assert out_big.shape == (300, D_OUT), out_big.shape
    assert jnp.allclose(out_big, ref_big, atol=1e-4, rtol=1e-4), "grid mismatch"

    # Auto-tiled path (per-chip tile cap, >=2 grid steps for v7x megacore).
    out_auto = jax.block_until_ready(xy_net_forward(x_big, prepared_bf16))
    ref_auto = _reference_forward(x_big, params, jnp.bfloat16)
    assert out_auto.shape == (300, D_OUT), out_auto.shape
    assert jnp.allclose(out_auto, ref_auto, atol=1e-2, rtol=1e-2), "auto mismatch"

    print("KERNEL_OK")
</pallas_src>

<mosaic_0001>
module attributes {stable_mosaic.version = 11 : i64} {
  func.func @_mlp_kernel(%arg0: i32, %arg1: memref<8x350xf32, #tpu.memory_space<vmem>>, %arg2: memref<350x256xf32, #tpu.memory_space<vmem>>, %arg3: memref<1x256xf32, #tpu.memory_space<vmem>>, %arg4: memref<256x128xf32, #tpu.memory_space<vmem>>, %arg5: memref<1x128xf32, #tpu.memory_space<vmem>>, %arg6: memref<128x128xf32, #tpu.memory_space<vmem>>, %arg7: memref<1x128xf32, #tpu.memory_space<vmem>>, %arg8: memref<128x3xf32, #tpu.memory_space<vmem>>, %arg9: memref<1x3xf32, #tpu.memory_space<vmem>>, %arg10: memref<8x3xf32, #tpu.memory_space<vmem>>) attributes {dimension_semantics = [#tpu.dimension_semantics<parallel>], iteration_bounds = array<i64: 1>, scalar_prefetch = 0 : i64, scratch_operands = 0 : i64, tpu.core_type = #tpu.core_type<tc>, window_params = [{transform_indices = @transform_0, window_bounds = array<i64: 8, 350>}, {pipeline_mode = #tpu.pipeline_mode<synchronous>, transform_indices = @transform_1, window_bounds = array<i64: 350, 256>}, {pipeline_mode = #tpu.pipeline_mode<synchronous>, transform_indices = @transform_2, window_bounds = array<i64: 1, 256>}, {pipeline_mode = #tpu.pipeline_mode<synchronous>, transform_indices = @transform_3, window_bounds = array<i64: 256, 128>}, {pipeline_mode = #tpu.pipeline_mode<synchronous>, transform_indices = @transform_4, window_bounds = array<i64: 1, 128>}, {pipeline_mode = #tpu.pipeline_mode<synchronous>, transform_indices = @transform_5, window_bounds = array<i64: 128, 128>}, {pipeline_mode = #tpu.pipeline_mode<synchronous>, transform_indices = @transform_6, window_bounds = array<i64: 1, 128>}, {pipeline_mode = #tpu.pipeline_mode<synchronous>, transform_indices = @transform_7, window_bounds = array<i64: 128, 3>}, {pipeline_mode = #tpu.pipeline_mode<synchronous>, transform_indices = @transform_8, window_bounds = array<i64: 1, 3>}, {transform_indices = @transform_9, window_bounds = array<i64: 8, 3>}]} {
    %c0 = arith.constant 0 : index
    %c0_0 = arith.constant 0 : index
    %0 = vector.load %arg1[%c0, %c0_0] : memref<8x350xf32, #tpu.memory_space<vmem>>, vector<8x350xf32>
    %c0_1 = arith.constant 0 : index
    %c0_2 = arith.constant 0 : index
    %1 = vector.load %arg2[%c0_1, %c0_2] : memref<350x256xf32, #tpu.memory_space<vmem>>, vector<350x256xf32>
    %cst = arith.constant dense<0.000000e+00> : vector<8x256xf32>
    %2 = tpu.matmul %0, %1, %cst {dimension_numbers = #tpu.dot_dimension_numbers<[1], [0], [0], [1], [0, 0, 1, 1], [], []>} : vector<8x350xf32>, vector<350x256xf32>, vector<8x256xf32> -> vector<8x256xf32>
    %c0_3 = arith.constant 0 : index
    %c0_4 = arith.constant 0 : index
    %3 = vector.load %arg3[%c0_3, %c0_4] : memref<1x256xf32, #tpu.memory_space<vmem>>, vector<1x256xf32>
    %4 = vector.broadcast %3 : vector<1x256xf32> to vector<8x256xf32>
    %5 = arith.addf %2, %4 : vector<8x256xf32>
    %cst_5 = arith.constant 0.000000e+00 : f32
    %6 = vector.broadcast %cst_5 : f32 to vector<8x256xf32>
    %7 = arith.maximumf %5, %6 : vector<8x256xf32>
    %c0_6 = arith.constant 0 : index
    %c0_7 = arith.constant 0 : index
    %8 = vector.load %arg4[%c0_6, %c0_7] : memref<256x128xf32, #tpu.memory_space<vmem>>, vector<256x128xf32>
    %cst_8 = arith.constant dense<0.000000e+00> : vector<8x128xf32>
    %9 = tpu.matmul %7, %8, %cst_8 {dimension_numbers = #tpu.dot_dimension_numbers<[1], [0], [0], [1], [0, 0, 1, 1], [], []>} : vector<8x256xf32>, vector<256x128xf32>, vector<8x128xf32> -> vector<8x128xf32>
    %c0_9 = arith.constant 0 : index
    %c0_10 = arith.constant 0 : index
    %10 = vector.load %arg5[%c0_9, %c0_10] : memref<1x128xf32, #tpu.memory_space<vmem>>, vector<1x128xf32>
    %11 = vector.broadcast %10 : vector<1x128xf32> to vector<8x128xf32>
    %12 = arith.addf %9, %11 : vector<8x128xf32>
    %cst_11 = arith.constant 0.000000e+00 : f32
    %13 = vector.broadcast %cst_11 : f32 to vector<8x128xf32>
    %14 = arith.maximumf %12, %13 : vector<8x128xf32>
    %c0_12 = arith.constant 0 : index
    %c0_13 = arith.constant 0 : index
    %15 = vector.load %arg6[%c0_12, %c0_13] : memref<128x128xf32, #tpu.memory_space<vmem>>, vector<128x128xf32>
    %cst_14 = arith.constant dense<0.000000e+00> : vector<8x128xf32>
    %16 = tpu.matmul %14, %15, %cst_14 {dimension_numbers = #tpu.dot_dimension_numbers<[1], [0], [0], [1], [0, 0, 1, 1], [], []>} : vector<8x128xf32>, vector<128x128xf32>, vector<8x128xf32> -> vector<8x128xf32>
    %c0_15 = arith.constant 0 : index
    %c0_16 = arith.constant 0 : index
    %17 = vector.load %arg7[%c0_15, %c0_16] : memref<1x128xf32, #tpu.memory_space<vmem>>, vector<1x128xf32>
    %18 = vector.broadcast %17 : vector<1x128xf32> to vector<8x128xf32>
    %19 = arith.addf %16, %18 : vector<8x128xf32>
    %cst_17 = arith.constant 0.000000e+00 : f32
    %20 = vector.broadcast %cst_17 : f32 to vector<8x128xf32>
    %21 = arith.maximumf %19, %20 : vector<8x128xf32>
    %c0_18 = arith.constant 0 : index
    %c0_19 = arith.constant 0 : index
    %22 = vector.load %arg8[%c0_18, %c0_19] : memref<128x3xf32, #tpu.memory_space<vmem>>, vector<128x3xf32>
    %cst_20 = arith.constant dense<0.000000e+00> : vector<8x3xf32>
    %23 = tpu.matmul %21, %22, %cst_20 {dimension_numbers = #tpu.dot_dimension_numbers<[1], [0], [0], [1], [0, 0, 1, 1], [], []>} : vector<8x128xf32>, vector<128x3xf32>, vector<8x3xf32> -> vector<8x3xf32>
    %c0_21 = arith.constant 0 : index
    %c0_22 = arith.constant 0 : index
    %24 = vector.load %arg9[%c0_21, %c0_22] : memref<1x3xf32, #tpu.memory_space<vmem>>, vector<1x3xf32>
    %25 = vector.broadcast %24 : vector<1x3xf32> to vector<8x3xf32>
    %26 = arith.addf %23, %25 : vector<8x3xf32>
    %c0_23 = arith.constant 0 : index
    %c0_24 = arith.constant 0 : index
    %27 = vector.load %arg10[%c0_23, %c0_24] : memref<8x3xf32, #tpu.memory_space<vmem>>, vector<8x3xf32>
    tpu.vector_store %arg10[%c0_23, %c0_24], %26 {strides = array<i32>} : memref<8x3xf32, #tpu.memory_space<vmem>>, vector<8x3xf32>,
    return
  }
  func.func @transform_0(%arg0: i32) -> (i32, i32) {
    %c0_i32 = arith.constant 0 : i32
    %c0_i32_0 = arith.constant 0 : i32
    return %arg0, %c0_i32 : i32, i32
  }
  func.func @transform_1(%arg0: i32) -> (i32, i32) {
    %c0_i32 = arith.constant 0 : i32
    %c0_i32_0 = arith.constant 0 : i32
    %c0_i32_1 = arith.constant 0 : i32
    return %c0_i32, %c0_i32_0 : i32, i32
  }
  func.func @transform_2(%arg0: i32) -> (i32, i32) {
    %c0_i32 = arith.constant 0 : i32
    %c0_i32_0 = arith.constant 0 : i32
    %c0_i32_1 = arith.constant 0 : i32
    return %c0_i32, %c0_i32_0 : i32, i32
  }
  func.func @transform_3(%arg0: i32) -> (i32, i32) {
    %c0_i32 = arith.constant 0 : i32
    %c0_i32_0 = arith.constant 0 : i32
    %c0_i32_1 = arith.constant 0 : i32
    return %c0_i32, %c0_i32_0 : i32, i32
  }
  func.func @transform_4(%arg0: i32) -> (i32, i32) {
    %c0_i32 = arith.constant 0 : i32
    %c0_i32_0 = arith.constant 0 : i32
    %c0_i32_1 = arith.constant 0 : i32
    return %c0_i32, %c0_i32_0 : i32, i32
  }
  func.func @transform_5(%arg0: i32) -> (i32, i32) {
    %c0_i32 = arith.constant 0 : i32
    %c0_i32_0 = arith.constant 0 : i32
    %c0_i32_1 = arith.constant 0 : i32
    return %c0_i32, %c0_i32_0 : i32, i32
  }
  func.func @transform_6(%arg0: i32) -> (i32, i32) {
    %c0_i32 = arith.constant 0 : i32
    %c0_i32_0 = arith.constant 0 : i32
    %c0_i32_1 = arith.constant 0 : i32
    return %c0_i32, %c0_i32_0 : i32, i32
  }
  func.func @transform_7(%arg0: i32) -> (i32, i32) {
    %c0_i32 = arith.constant 0 : i32
    %c0_i32_0 = arith.constant 0 : i32
    %c0_i32_1 = arith.constant 0 : i32
    return %c0_i32, %c0_i32_0 : i32, i32
  }
  func.func @transform_8(%arg0: i32) -> (i32, i32) {
    %c0_i32 = arith.constant 0 : i32
    %c0_i32_0 = arith.constant 0 : i32
    %c0_i32_1 = arith.constant 0 : i32
    return %c0_i32, %c0_i32_0 : i32, i32
  }
  func.func @transform_9(%arg0: i32) -> (i32, i32) {
    %c0_i32 = arith.constant 0 : i32
    %c0_i32_0 = arith.constant 0 : i32
    return %arg0, %c0_i32 : i32, i32
  }
}

module attributes {stable_mosaic.version = 11 : i64} {
  func.func @_mlp_kernel(%arg0: i32, %arg1: memref<8x350xf32, #tpu.memory_space<vmem>>, %arg2: memref<350x256xf32, #tpu.memory_space<vmem>>, %arg3: memref<1x256xf32, #tpu.memory_space<vmem>>, %arg4: memref<256x128xf32, #tpu.memory_space<vmem>>, %arg5: memref<1x128xf32, #tpu.memory_space<vmem>>, %arg6: memref<128x128xf32, #tpu.memory_space<vmem>>, %arg7: memref<1x128xf32, #tpu.memory_space<vmem>>, %arg8: memref<128x3xf32, #tpu.memory_space<vmem>>, %arg9: memref<1x3xf32, #tpu.memory_space<vmem>>, %arg10: memref<8x3xf32, #tpu.memory_space<vmem>>) attributes {dimension_semantics = [#tpu.dimension_semantics<parallel>], iteration_bounds = array<i64: 1>, scalar_prefetch = 0 : i64, scratch_operands = 0 : i64, tpu.core_type = #tpu.core_type<tc>, window_params = [{transform_indices = @transform_0, window_bounds = array<i64: 8, 350>}, {pipeline_mode = #tpu.pipeline_mode<synchronous>, transform_indices = @transform_1, window_bounds = array<i64: 350, 256>}, {pipeline_mode = #tpu.pipeline_mode<synchronous>, transform_indices = @transform_2, window_bounds = array<i64: 1, 256>}, {pipeline_mode = #tpu.pipeline_mode<synchronous>, transform_indices = @transform_3, window_bounds = array<i64: 256, 128>}, {pipeline_mode = #tpu.pipeline_mode<synchronous>, transform_indices = @transform_4, window_bounds = array<i64: 1, 128>}, {pipeline_mode = #tpu.pipeline_mode<synchronous>, transform_indices = @transform_5, window_bounds = array<i64: 128, 128>}, {pipeline_mode = #tpu.pipeline_mode<synchronous>, transform_indices = @transform_6, window_bounds = array<i64: 1, 128>}, {pipeline_mode = #tpu.pipeline_mode<synchronous>, transform_indices = @transform_7, window_bounds = array<i64: 128, 3>}, {pipeline_mode = #tpu.pipeline_mode<synchronous>, transform_indices = @transform_8, window_bounds = array<i64: 1, 3>}, {transform_indices = @transform_9, window_bounds = array<i64: 8, 3>}]} {
    %c0 = arith.constant 0 : index
    %c0_0 = arith.constant 0 : index
    %0 = vector.load %arg1[%c0, %c0_0] : memref<8x350xf32, #tpu.memory_space<vmem>>, vector<8x350xf32>
    %c0_1 = arith.constant 0 : index
    %c0_2 = arith.constant 0 : index
    %1 = vector.load %arg2[%c0_1, %c0_2] : memref<350x256xf32, #tpu.memory_space<vmem>>, vector<350x256xf32>
    %cst = arith.constant dense<0.000000e+00> : vector<8x256xf32>
    %2 = tpu.matmul %0, %1, %cst {dimension_numbers = #tpu.dot_dimension_numbers<[1], [0], [0], [1], [0, 0, 1, 1], [], []>} : vector<8x350xf32>, vector<350x256xf32>, vector<8x256xf32> -> vector<8x256xf32>
    %c0_3 = arith.constant 0 : index
    %c0_4 = arith.constant 0 : index
    %3 = vector.load %arg3[%c0_3, %c0_4] : memref<1x256xf32, #tpu.memory_space<vmem>>, vector<1x256xf32>
    %4 = vector.broadcast %3 : vector<1x256xf32> to vector<8x256xf32>
    %5 = arith.addf %2, %4 : vector<8x256xf32>
    %cst_5 = arith.constant 0.000000e+00 : f32
    %6 = vector.broadcast %cst_5 : f32 to vector<8x256xf32>
    %7 = arith.maximumf %5, %6 : vector<8x256xf32>
    %c0_6 = arith.constant 0 : index
    %c0_7 = arith.constant 0 : index
    %8 = vector.load %arg4[%c0_6, %c0_7] : memref<256x128xf32, #tpu.memory_space<vmem>>, vector<256x128xf32>
    %cst_8 = arith.constant dense<0.000000e+00> : vector<8x128xf32>
    %9 = tpu.matmul %7, %8, %cst_8 {dimension_numbers = #tpu.dot_dimension_numbers<[1], [0], [0], [1], [0, 0, 1, 1], [], []>} : vector<8x256xf32>, vector<256x128xf32>, vector<8x128xf32> -> vector<8x128xf32>
    %c0_9 = arith.constant 0 : index
    %c0_10 = arith.constant 0 : index
    %10 = vector.load %arg5[%c0_9, %c0_10] : memref<1x128xf32, #tpu.memory_space<vmem>>, vector<1x128xf32>
    %11 = vector.broadcast %10 : vector<1x128xf32> to vector<8x128xf32>
    %12 = arith.addf %9, %11 : vector<8x128xf32>
    %cst_11 = arith.constant 0.000000e+00 : f32
    %13 = vector.broadcast %cst_11 : f32 to vector<8x128xf32>
    %14 = arith.maximumf %12, %13 : vector<8x128xf32>
    %c0_12 = arith.constant 0 : index
    %c0_13 = arith.constant 0 : index
    %15 = vector.load %arg6[%c0_12, %c0_13] : memref<128x128xf32, #tpu.memory_space<vmem>>, vector<128x128xf32>
    %cst_14 = arith.constant dense<0.000000e+00> : vector<8x128xf32>
    %16 = tpu.matmul %14, %15, %cst_14 {dimension_numbers = #tpu.dot_dimension_numbers<[1], [0], [0], [1], [0, 0, 1, 1], [], []>} : vector<8x128xf32>, vector<128x128xf32>, vector<8x128xf32> -> vector<8x128xf32>
    %c0_15 = arith.constant 0 : index
    %c0_16 = arith.constant 0 : index
    %17 = vector.load %arg7[%c0_15, %c0_16] : memref<1x128xf32, #tpu.memory_space<vmem>>, vector<1x128xf32>
    %18 = vector.broadcast %17 : vector<1x128xf32> to vector<8x128xf32>
    %19 = arith.addf %16, %18 : vector<8x128xf32>
    %cst_17 = arith.constant 0.000000e+00 : f32
    %20 = vector.broadcast %cst_17 : f32 to vector<8x128xf32>
    %21 = arith.maximumf %19, %20 : vector<8x128xf32>
    %c0_18 = arith.constant 0 : index
    %c0_19 = arith.constant 0 : index
    %22 = vector.load %arg8[%c0_18, %c0_19] : memref<128x3xf32, #tpu.memory_space<vmem>>, vector<128x3xf32>
    %cst_20 = arith.constant dense<0.000000e+00> : vector<8x3xf32>
    %23 = tpu.matmul %21, %22, %cst_20 {dimension_numbers = #tpu.dot_dimension_numbers<[1], [0], [0], [1], [0, 0, 1, 1], [], []>} : vector<8x128xf32>, vector<128x3xf32>, vector<8x3xf32> -> vector<8x3xf32>
    %c0_21 = arith.constant 0 : index
    %c0_22 = arith.constant 0 : index
    %24 = vector.load %arg9[%c0_21, %c0_22] : memref<1x3xf32, #tpu.memory_space<vmem>>, vector<1x3xf32>
    %25 = vector.broadcast %24 : vector<1x3xf32> to vector<8x3xf32>
    %26 = arith.addf %23, %25 : vector<8x3xf32>
    %c0_23 = arith.constant 0 : index
    %c0_24 = arith.constant 0 : index
    %27 = vector.load %arg10[%c0_23, %c0_24] : memref<8x3xf32, #tpu.memory_space<vmem>>, vector<8x3xf32>
    tpu.vector_store %arg10[%c0_23, %c0_24], %26 {strides = array<i32>} : memref<8x3xf32, #tpu.memory_space<vmem>>, vector<8x3xf32>,
    return
  }
  func.func @transform_0(%arg0: i32) -> (i32, i32) {
    %c0_i32 = arith.constant 0 : i32
    %c0_i32_0 = arith.constant 0 : i32
    return %arg0, %c0_i32 : i32, i32
  }
  func.func @transform_1(%arg0: i32) -> (i32, i32) {
    %c0_i32 = arith.constant 0 : i32
    %c0_i32_0 = arith.constant 0 : i32
    %c0_i32_1 = arith.constant 0 : i32
    return %c0_i32, %c0_i32_0 : i32, i32
  }
  func.func @transform_2(%arg0: i32) -> (i32, i32) {
    %c0_i32 = arith.constant 0 : i32
    %c0_i32_0 = arith.constant 0 : i32
    %c0_i32_1 = arith.constant 0 : i32
    return %c0_i32, %c0_i32_0 : i32, i32
  }
  func.func @transform_3(%arg0: i32) -> (i32, i32) {
    %c0_i32 = arith.constant 0 : i32
    %c0_i32_0 = arith.constant 0 : i32
    %c0_i32_1 = arith.constant 0 : i32
    return %c0_i32, %c0_i32_0 : i32, i32
  }
  func.func @transform_4(%arg0: i32) -> (i32, i32) {
    %c0_i32 = arith.constant 0 : i32
    %c0_i32_0 = arith.constant 0 : i32
    %c0_i32_1 = arith.constant 0 : i32
    return %c0_i32, %c0_i32_0 : i32, i32
  }
  func.func @transform_5(%arg0: i32) -> (i32, i32) {
    %c0_i32 = arith.constant 0 : i32
    %c0_i32_0 = arith.constant 0 : i32
    %c0_i32_1 = arith.constant 0 : i32
    return %c0_i32, %c0_i32_0 : i32, i32
  }
  func.func @transform_6(%arg0: i32) -> (i32, i32) {
    %c0_i32 = arith.constant 0 : i32
    %c0_i32_0 = arith.constant 0 : i32
    %c0_i32_1 = arith.constant 0 : i32
    return %c0_i32, %c0_i32_0 : i32, i32
  }
  func.func @transform_7(%arg0: i32) -> (i32, i32) {
    %c0_i32 = arith.constant 0 : i32
    %c0_i32_0 = arith.constant 0 : i32
    %c0_i32_1 = arith.constant 0 : i32
    return %c0_i32, %c0_i32_0 : i32, i32
  }
  func.func @transform_8(%arg0: i32) -> (i32, i32) {
    %c0_i32 = arith.constant 0 : i32
    %c0_i32_0 = arith.constant 0 : i32
    %c0_i32_1 = arith.constant 0 : i32
    return %c0_i32, %c0_i32_0 : i32, i32
  }
  func.func @transform_9(%arg0: i32) -> (i32, i32) {
    %c0_i32 = arith.constant 0 : i32
    %c0_i32_0 = arith.constant 0 : i32
    return %arg0, %c0_i32 : i32, i32
  }
}

</mosaic_0001>

<llo_original>
// kernel: tpu_custom_call.1
$region0: #{tpu_custom_call.1}
  #allocation0 [shape = 'u32[]', space=smem, size = 0x4, offset = 0x4, fixed_abs, tag = 'smem constant byte address 0x4 - core index']
  #allocation1 [shape = 'u32[72,128]{1,0:T(1,128)}', space=vmem, size = 0x9000, scoped, tag = 'internal scratch']
  %s0 = inlined_call_operand.hbm [shape: f32[8,350], index: 0, kind: input, shape index: {}]
  %s1 = inlined_call_operand.hbm [shape: f32[350,256], index: 1, kind: input, shape index: {}]
  %s2 = inlined_call_operand.vmem [shape: f32[1,256], index: 2, kind: input, shape index: {}]
  %s3 = inlined_call_operand.hbm [shape: f32[256,128], index: 3, kind: input, shape index: {}]
  %s4 = inlined_call_operand.vmem [shape: f32[1,128], index: 4, kind: input, shape index: {}]
  %s5 = inlined_call_operand.vmem [shape: f32[128,128], index: 5, kind: input, shape index: {}]
  %s6 = inlined_call_operand.vmem [shape: f32[1,128], index: 6, kind: input, shape index: {}]
  %s7 = inlined_call_operand.vmem [shape: f32[128,3], index: 7, kind: input, shape index: {}]
  %s8 = inlined_call_operand.vmem [shape: f32[1,3], index: 8, kind: input, shape index: {}]
  %s9 = inlined_call_operand.vmem [shape: f32[8,3], index: 9, kind: output, shape index: {}]
  %s10 = sld [smem:[#allocation0]]
  $region58: #{tpu_custom_call.1} parent=0
    _
  %s12 = ssub.s32 1, %s10
  %s13 = scalar_select 0, %s12, %s10
  $region1: #{tpu_custom_call.1} parent=0
    #allocation2 [shape = 'u8[12288]{0}', space=vmem, size = 0x3000, scoped, tag = 'input window, operand 0, single buffered']
    #allocation3 [shape = 's32[1]{0}', space=sflag, size = 0x4, scoped, tag = 'scoped memory for tpu_custom_call.1']
    #allocation4 [shape = 'u8[360448]{0}', space=vmem, size = 0x58000, scoped, tag = 'input window, operand 1, single buffered']
    #allocation5 [shape = 's32[1]{0}', space=sflag, size = 0x4, scoped, tag = 'scoped memory for tpu_custom_call.1']
    #allocation6 [shape = 'u8[131072]{0}', space=vmem, size = 0x20000, scoped, tag = 'input window, operand 3, single buffered']
    %14 = vsyncpa [#allocation3], 0
    %15 = vsyncpa [#allocation5], 0
    // Predicated region
    $region2: #{tpu_custom_call.1} parent=1 // pred_check
      _
    $region3: #{tpu_custom_call.1} parent=1 // pred_check_branch
      %17 = sbr.rel (0) target = $region5
    $region4: #{tpu_custom_call.1} parent=1 // pred_region
      %19 = vsyncadd [#allocation3], 0
      %s21 = sshll.u32 %s0, 4
      %s22 = int_to_ptr.hbm [resolvable:$true] %s21
      %s23 = sshll.u32 [#allocation2], 4
      %s24 = int_to_ptr.vmem [resolvable:$true] %s23
      %26 = dma.hbm_to_vmem [thread:$0]  %s22, 384, %s24, [#allocation3]
    $region5: #{tpu_custom_call.1} parent=1 // pred_fallthru
      _
    // Predicated region
    $region6: #{tpu_custom_call.1} parent=1 // pred_check
      _
    $region7: #{tpu_custom_call.1} parent=1 // pred_check_branch
      %28 = sbr.rel (0) target = $region9
    $region8: #{tpu_custom_call.1} parent=1 // pred_region
      %30 = vsyncadd [#allocation5], 0
      %s31 = sshll.u32 %s1, 4
      %s32 = int_to_ptr.hbm [resolvable:$true] %s31
      %s33 = sshll.u32 [#allocation4], 4
      %s34 = int_to_ptr.vmem [resolvable:$true] %s33
      %39 = dma.hbm_to_vmem [thread:$0]  %s32, 11264, %s34, [#allocation5], 256, 256, 16
    $region9: #{tpu_custom_call.1} parent=1 // pred_fallthru
      _
    // Predicated region
    $region10: #{tpu_custom_call.1} parent=1 // pred_check
      _
    $region11: #{tpu_custom_call.1} parent=1 // pred_check_branch
      %41 = sbr.rel (0) target = $region13
    $region12: #{tpu_custom_call.1} parent=1 // pred_region
      _
    $region13: #{tpu_custom_call.1} parent=1 // pred_fallthru
      _
    // Predicated region
    $region14: #{tpu_custom_call.1} parent=1 // pred_check
      _
    $region15: #{tpu_custom_call.1} parent=1 // pred_check_branch
      %43 = sbr.rel (0) target = $region17
    $region16: #{tpu_custom_call.1} parent=1 // pred_region
      %45 = vsyncadd [#allocation5], 0
      %s46 = sshll.u32 %s3, 4
      %s47 = int_to_ptr.hbm [resolvable:$true] %s46
      %s48 = sshll.u32 [#allocation6], 4
      %s49 = int_to_ptr.vmem [resolvable:$true] %s48
      %54 = dma.hbm_to_vmem [thread:$0]  %s47, 4096, %s49, [#allocation5], 128, 128, 8
    $region17: #{tpu_custom_call.1} parent=1 // pred_fallthru
      _
    // Predicated region
    $region18: #{tpu_custom_call.1} parent=1 // pred_check
      _
    $region19: #{tpu_custom_call.1} parent=1 // pred_check_branch
      %56 = sbr.rel (0) target = $region21
    $region20: #{tpu_custom_call.1} parent=1 // pred_region
      _
    $region21: #{tpu_custom_call.1} parent=1 // pred_fallthru
      _
    // Predicated region
    $region22: #{tpu_custom_call.1} parent=1 // pred_check
      _
    $region23: #{tpu_custom_call.1} parent=1 // pred_check_branch
      %58 = sbr.rel (0) target = $region25
    $region24: #{tpu_custom_call.1} parent=1 // pred_region
      _
    $region25: #{tpu_custom_call.1} parent=1 // pred_fallthru
      _
    // Predicated region
    $region26: #{tpu_custom_call.1} parent=1 // pred_check
      _
    $region27: #{tpu_custom_call.1} parent=1 // pred_check_branch
      %60 = sbr.rel (0) target = $region29
    $region28: #{tpu_custom_call.1} parent=1 // pred_region
      _
    $region29: #{tpu_custom_call.1} parent=1 // pred_fallthru
      _
    // Predicated region
    $region30: #{tpu_custom_call.1} parent=1 // pred_check
      _
    $region31: #{tpu_custom_call.1} parent=1 // pred_check_branch
      %62 = sbr.rel (0) target = $region33
    $region32: #{tpu_custom_call.1} parent=1 // pred_region
      _
    $region33: #{tpu_custom_call.1} parent=1 // pred_fallthru
      _
    // Predicated region
    $region34: #{tpu_custom_call.1} parent=1 // pred_check
      _
    $region35: #{tpu_custom_call.1} parent=1 // pred_check_branch
      %64 = sbr.rel (0) target = $region37
    $region36: #{tpu_custom_call.1} parent=1 // pred_region
      _
    $region37: #{tpu_custom_call.1} parent=1 // pred_fallthru
      _
    // Predicated region
    $region38: #{tpu_custom_call.1} parent=1 // pred_check
      _
    $region39: #{tpu_custom_call.1} parent=1 // pred_check_branch
      %66 = sbr.rel (0) target = $region41
    $region40: #{tpu_custom_call.1} parent=1 // pred_region
      %68 = dma.done [#allocation3], 384
    $region41: #{tpu_custom_call.1} parent=1 // pred_fallthru
      _
    // Predicated region
    $region42: #{tpu_custom_call.1} parent=1 // pred_check
      _
    $region43: #{tpu_custom_call.1} parent=1 // pred_check_branch
      %70 = sbr.rel (0) target = $region45
    $region44: #{tpu_custom_call.1} parent=1 // pred_region
      %72 = dma.done [#allocation5], 11264
    $region45: #{tpu_custom_call.1} parent=1 // pred_fallthru
      _
    // Predicated region
    $region46: #{tpu_custom_call.1} parent=1 // pred_check
      _
    $region47: #{tpu_custom_call.1} parent=1 // pred_check_branch
      %74 = sbr.rel (0) target = $region49
    $region48: #{tpu_custom_call.1} parent=1 // pred_region
      %76 = dma.done [#allocation5], 4096
    $region49: #{tpu_custom_call.1} parent=1 // pred_fallthru
      _
    %v77 = vld [vmem:[#allocation2] sm:$0xff]
    %v78 = vld [vmem:[#allocation2 + $0x8] sm:$0xff]
    %v79 = vld [vmem:[#allocation2 + $0x10] sm:$0xff]
    %v80 = vld [vmem:[#allocation4] sm:$0xff]
    %v81 = vld [vmem:[#allocation4 + $0x8] sm:$0xff]
    %v82 = vld [vmem:[#allocation4 + $0x10] sm:$0xff]
    %v83 = vld [vmem:[#allocation4 + $0x18] sm:$0xff]
    %v84 = vld [vmem:[#allocation4 + $0x20] sm:$0xff]
    %v85 = vld [vmem:[#allocation4 + $0x28] sm:$0xff]
    %v86 = vld [vmem:[#allocation4 + $0x30] sm:$0xff]
    %v87 = vld [vmem:[#allocation4 + $0x38] sm:$0xff]
    %v88 = vld [vmem:[#allocation4 + $0x40] sm:$0xff]
    %v89 = vld [vmem:[#allocation4 + $0x48] sm:$0xff]
    %v90 = vld [vmem:[#allocation4 + $0x50] sm:$0xff]
    %v91 = vld [vmem:[#allocation4 + $0x58] sm:$0xff]
    %v92 = vld [vmem:[#allocation4 + $0x60] sm:$0xff]
    %v93 = vld [vmem:[#allocation4 + $0x68] sm:$0xff]
    %v94 = vld [vmem:[#allocation4 + $0x70] sm:$0xff]
    %v95 = vld [vmem:[#allocation4 + $0x78] sm:$0xff]
    %v96 = vld [vmem:[#allocation4 + $0x80] sm:$0xff]
    %v97 = vld [vmem:[#allocation4 + $0x88] sm:$0xff]
    %v98 = vld [vmem:[#allocation4 + $0x90] sm:$0xff]
    %v99 = vld [vmem:[#allocation4 + $0x98] sm:$0xff]
    %v100 = vld [vmem:[#allocation4 + $0xa0] sm:$0xff]
    %v101 = vld [vmem:[#allocation4 + $0xa8] sm:$0xff]
    %v102 = vld [vmem:[#allocation4 + $0xb0] sm:$0xff]
    %v103 = vld [vmem:[#allocation4 + $0xb8] sm:$0xff]
    %v104 = vld [vmem:[#allocation4 + $0xc0] sm:$0xff]
    %v105 = vld [vmem:[#allocation4 + $0xc8] sm:$0xff]
    %v106 = vld [vmem:[#allocation4 + $0xd0] sm:$0xff]
    %v107 = vld [vmem:[#allocation4 + $0xd8] sm:$0xff]
    %v108 = vld [vmem:[#allocation4 + $0xe0] sm:$0xff]
    %v109 = vld [vmem:[#allocation4 + $0xe8] sm:$0xff]
    %v110 = vld [vmem:[#allocation4 + $0xf0] sm:$0xff]
    %v111 = vld [vmem:[#allocation4 + $0xf8] sm:$0xff]
    %v112 = vld [vmem:[#allocation4 + $0x100] sm:$0xff]
    %v113 = vld [vmem:[#allocation4 + $0x108] sm:$0xff]
    %v114 = vld [vmem:[#allocation4 + $0x110] sm:$0xff]
    %v115 = vld [vmem:[#allocation4 + $0x118] sm:$0xff]
    %v116 = vld [vmem:[#allocation4 + $0x120] sm:$0xff]
    %v117 = vld [vmem:[#allocation4 + $0x128] sm:$0xff]
    %v118 = vld [vmem:[#allocation4 + $0x130] sm:$0xff]
    %v119 = vld [vmem:[#allocation4 + $0x138] sm:$0xff]
    %v120 = vld [vmem:[#allocation4 + $0x140] sm:$0xff]
    %v121 = vld [vmem:[#allocation4 + $0x148] sm:$0xff]
    %v122 = vld [vmem:[#allocation4 + $0x150] sm:$0xff]
    %v123 = vld [vmem:[#allocation4 + $0x158] sm:$0xff]
    %v124 = vld [vmem:[#allocation4 + $0x160] sm:$0xff]
    %v125 = vld [vmem:[#allocation4 + $0x168] sm:$0xff]
    %v126 = vld [vmem:[#allocation4 + $0x170] sm:$0xff]
    %v127 = vld [vmem:[#allocation4 + $0x178] sm:$0xff]
    %v128 = vld [vmem:[#allocation4 + $0x180] sm:$0xff]
    %v129 = vld [vmem:[#allocation4 + $0x188] sm:$0xff]
    %v130 = vld [vmem:[#allocation4 + $0x190] sm:$0xff]
    %v131 = vld [vmem:[#allocation4 + $0x198] sm:$0xff]
    %v132 = vld [vmem:[#allocation4 + $0x1a0] sm:$0xff]
    %v133 = vld [vmem:[#allocation4 + $0x1a8] sm:$0xff]
    %v134 = vld [vmem:[#allocation4 + $0x1b0] sm:$0xff]
    %v135 = vld [vmem:[#allocation4 + $0x1b8] sm:$0xff]
    %v136 = vld [vmem:[#allocation4 + $0x1c0] sm:$0xff]
    %v137 = vld [vmem:[#allocation4 + $0x1c8] sm:$0xff]
    %v138 = vld [vmem:[#allocation4 + $0x1d0] sm:$0xff]
    %v139 = vld [vmem:[#allocation4 + $0x1d8] sm:$0xff]
    %v140 = vld [vmem:[#allocation4 + $0x1e0] sm:$0xff]
    %v141 = vld [vmem:[#allocation4 + $0x1e8] sm:$0xff]
    %v142 = vld [vmem:[#allocation4 + $0x1f0] sm:$0xff]
    %v143 = vld [vmem:[#allocation4 + $0x1f8] sm:$0xff]
    %v144 = vld [vmem:[#allocation4 + $0x200] sm:$0xff]
    %v145 = vld [vmem:[#allocation4 + $0x208] sm:$0xff]
    %v146 = vld [vmem:[#allocation4 + $0x210] sm:$0xff]
    %v147 = vld [vmem:[#allocation4 + $0x218] sm:$0xff]
    %v148 = vld [vmem:[#allocation4 + $0x220] sm:$0xff]
    %v149 = vld [vmem:[#allocation4 + $0x228] sm:$0xff]
    %v150 = vld [vmem:[#allocation4 + $0x230] sm:$0xff]
    %v151 = vld [vmem:[#allocation4 + $0x238] sm:$0xff]
    %v152 = vld [vmem:[#allocation4 + $0x240] sm:$0xff]
    %v153 = vld [vmem:[#allocation4 + $0x248] sm:$0xff]
    %v154 = vld [vmem:[#allocation4 + $0x250] sm:$0xff]
    %v155 = vld [vmem:[#allocation4 + $0x258] sm:$0xff]
    %v156 = vld [vmem:[#allocation4 + $0x260] sm:$0xff]
    %v157 = vld [vmem:[#allocation4 + $0x268] sm:$0xff]
    %v158 = vld [vmem:[#allocation4 + $0x270] sm:$0xff]
    %v159 = vld [vmem:[#allocation4 + $0x278] sm:$0xff]
    %v160 = vld [vmem:[#allocation4 + $0x280] sm:$0xff]
    %v161 = vld [vmem:[#allocation4 + $0x288] sm:$0xff]
    %v162 = vld [vmem:[#allocation4 + $0x290] sm:$0xff]
    %v163 = vld [vmem:[#allocation4 + $0x298] sm:$0xff]
    %v164 = vld [vmem:[#allocation4 + $0x2a0] sm:$0xff]
    %v165 = vld [vmem:[#allocation4 + $0x2a8] sm:$0xff]
    %v166 = vld [vmem:[#allocation4 + $0x2b0] sm:$0x3f]
    %v167 = vld [vmem:[#allocation4 + $0x2b8] sm:$0x3f]
    %v168 = vld [vmem:[%s2] sm:$0x3]
    %v170 = vperm.slane %v168, 0
    %v171 = vperm.slane %v168, 1
    %vm174 = vcmask 769024
    %v176 = vsel %vm174, %v79, 0
    %vm178 = vcmask 1045504
    %v180 = vsel %vm178, %v166, 0
    %v183 = vsel %vm178, %v167, 0
    %185 = vmatpush.msra.mxu0 %v110
    %186 = vmatpush.msra.mxu0 %v108
    %187 = vmatpush.msra.mxu0 %v106
    %188 = vmatpush.msra.mxu0 %v104
    %189 = vmatpush.msra.mxu0 %v102
    %190 = vmatpush.msra.mxu0 %v100
    %191 = vmatpush.msra.mxu0 %v98
    %192 = vmatpush.msra.mxu0 %v96
    %193 = vmatpush.msra.mxu0 %v94
    %194 = vmatpush.msra.mxu0 %v92
    %195 = vmatpush.msra.mxu0 %v90
    %196 = vmatpush.msra.mxu0 %v88
    %197 = vmatpush.msra.mxu0 %v86
    %198 = vmatpush.msra.mxu0 %v84
    %199 = vmatpush.msra.mxu0 %v82
    %200 = vmatpush.msra.mxu0 %v80
    %201 = vmatmul.f32.gmra.mxu0 %v77
    %v202 = vpop.f32.mrf.mxu0
    %v203 = vadd.f32 %v170, %v202
    %204 = vdwg.mxu0
    %205 = vmatpush.msra.mxu0 %v142
    %206 = vmatpush.msra.mxu0 %v140
    %207 = vmatpush.msra.mxu0 %v138
    %208 = vmatpush.msra.mxu0 %v136
    %209 = vmatpush.msra.mxu0 %v134
    %210 = vmatpush.msra.mxu0 %v132
    %211 = vmatpush.msra.mxu0 %v130
    %212 = vmatpush.msra.mxu0 %v128
    %213 = vmatpush.msra.mxu0 %v126
    %214 = vmatpush.msra.mxu0 %v124
    %215 = vmatpush.msra.mxu0 %v122
    %216 = vmatpush.msra.mxu0 %v120
    %217 = vmatpush.msra.mxu0 %v118
    %218 = vmatpush.msra.mxu0 %v116
    %219 = vmatpush.msra.mxu0 %v114
    %220 = vmatpush.msra.mxu0 %v112
    %221 = vmatmul.f32.gmra.mxu0 %v78
    %v222 = vpop.f32.mrf.mxu0
    %v223 = vadd.f32 %v203, %v222
    %224 = vdwg.mxu0
    %225 = vmatpush.msra.mxu0 0.0
    %226 = vmatpush.msra.mxu0 0.0
    %227 = vmatpush.msra.mxu0 0.0
    %228 = vmatpush.msra.mxu0 0.0
    %229 = vmatpush.msra.mxu0 %v180
    %230 = vmatpush.msra.mxu0 %v164
    %231 = vmatpush.msra.mxu0 %v162
    %232 = vmatpush.msra.mxu0 %v160
    %233 = vmatpush.msra.mxu0 %v158
    %234 = vmatpush.msra.mxu0 %v156
    %235 = vmatpush.msra.mxu0 %v154
    %236 = vmatpush.msra.mxu0 %v152
    %237 = vmatpush.msra.mxu0 %v150
    %238 = vmatpush.msra.mxu0 %v148
    %239 = vmatpush.msra.mxu0 %v146
    %240 = vmatpush.msra.mxu0 %v144
    %241 = vmatmul.f32.gmra.mxu0 %v176
    %v242 = vpop.f32.mrf.mxu0
    %v243 = vadd.f32 %v223, %v242
    %244 = vdwg.mxu0
    %245 = vmatpush.msra.mxu0 %v111
    %246 = vmatpush.msra.mxu0 %v109
    %247 = vmatpush.msra.mxu0 %v107
    %248 = vmatpush.msra.mxu0 %v105
    %249 = vmatpush.msra.mxu0 %v103
    %250 = vmatpush.msra.mxu0 %v101
    %251 = vmatpush.msra.mxu0 %v99
    %252 = vmatpush.msra.mxu0 %v97
    %253 = vmatpush.msra.mxu0 %v95
    %254 = vmatpush.msra.mxu0 %v93
    %255 = vmatpush.msra.mxu0 %v91
    %256 = vmatpush.msra.mxu0 %v89
    %257 = vmatpush.msra.mxu0 %v87
    %258 = vmatpush.msra.mxu0 %v85
    %259 = vmatpush.msra.mxu0 %v83
    %260 = vmatpush.msra.mxu0 %v81
    %261 = vmatmul.f32.gmra.mxu0 %v77
    %v262 = vpop.f32.mrf.mxu0
    %v263 = vadd.f32 %v171, %v262
    %264 = vdwg.mxu0
    %265 = vmatpush.msra.mxu0 %v143
    %266 = vmatpush.msra.mxu0 %v141
    %267 = vmatpush.msra.mxu0 %v139
    %268 = vmatpush.msra.mxu0 %v137
    %269 = vmatpush.msra.mxu0 %v135
    %270 = vmatpush.msra.mxu0 %v133
    %271 = vmatpush.msra.mxu0 %v131
    %272 = vmatpush.msra.mxu0 %v129
    %273 = vmatpush.msra.mxu0 %v127
    %274 = vmatpush.msra.mxu0 %v125
    %275 = vmatpush.msra.mxu0 %v123
    %276 = vmatpush.msra.mxu0 %v121
    %277 = vmatpush.msra.mxu0 %v119
    %278 = vmatpush.msra.mxu0 %v117
    %279 = vmatpush.msra.mxu0 %v115
    %280 = vmatpush.msra.mxu0 %v113
    %281 = vmatmul.f32.gmra.mxu0 %v78
    %v282 = vpop.f32.mrf.mxu0
    %v283 = vadd.f32 %v263, %v282
    %284 = vdwg.mxu0
    %285 = vmatpush.msra.mxu0 0.0
    %286 = vmatpush.msra.mxu0 0.0
    %287 = vmatpush.msra.mxu0 0.0
    %288 = vmatpush.msra.mxu0 0.0
    %289 = vmatpush.msra.mxu0 %v183
    %290 = vmatpush.msra.mxu0 %v165
    %291 = vmatpush.msra.mxu0 %v163
    %292 = vmatpush.msra.mxu0 %v161
    %293 = vmatpush.msra.mxu0 %v159
    %294 = vmatpush.msra.mxu0 %v157
    %295 = vmatpush.msra.mxu0 %v155
    %296 = vmatpush.msra.mxu0 %v153
    %297 = vmatpush.msra.mxu0 %v151
    %298 = vmatpush.msra.mxu0 %v149
    %299 = vmatpush.msra.mxu0 %v147
    %300 = vmatpush.msra.mxu0 %v145
    %301 = vmatmul.f32.gmra.mxu0 %v176
    %v302 = vpop.f32.mrf.mxu0
    %v303 = vadd.f32 %v283, %v302
    %304 = vdwg.mxu0
    %v305 = vmax.f32 %v243, 0.0
    %v306 = vmax.f32 %v303, 0.0
    %v307 = vld [vmem:[#allocation6] sm:$0xff]
    %v308 = vld [vmem:[#allocation6 + $0x8] sm:$0xff]
    %v309 = vld [vmem:[#allocation6 + $0x10] sm:$0xff]
    %v310 = vld [vmem:[#allocation6 + $0x18] sm:$0xff]
    %v311 = vld [vmem:[#allocation6 + $0x20] sm:$0xff]
    %v312 = vld [vmem:[#allocation6 + $0x28] sm:$0xff]
    %v313 = vld [vmem:[#allocation6 + $0x30] sm:$0xff]
    %v314 = vld [vmem:[#allocation6 + $0x38] sm:$0xff]
    %v315 = vld [vmem:[#allocation6 + $0x40] sm:$0xff]
    %v316 = vld [vmem:[#allocation6 + $0x48] sm:$0xff]
    %v317 = vld [vmem:[#allocation6 + $0x50] sm:$0xff]
    %v318 = vld [vmem:[#allocation6 + $0x58] sm:$0xff]
    %v319 = vld [vmem:[#allocation6 + $0x60] sm:$0xff]
    %v320 = vld [vmem:[#allocation6 + $0x68] sm:$0xff]
    %v321 = vld [vmem:[#allocation6 + $0x70] sm:$0xff]
    %v322 = vld [vmem:[#allocation6 + $0x78] sm:$0xff]
    %v323 = vld [vmem:[#allocation6 + $0x80] sm:$0xff]
    %v324 = vld [vmem:[#allocation6 + $0x88] sm:$0xff]
    %v325 = vld [vmem:[#allocation6 + $0x90] sm:$0xff]
    %v326 = vld [vmem:[#allocation6 + $0x98] sm:$0xff]
    %v327 = vld [vmem:[#allocation6 + $0xa0] sm:$0xff]
    %v328 = vld [vmem:[#allocation6 + $0xa8] sm:$0xff]
    %v329 = vld [vmem:[#allocation6 + $0xb0] sm:$0xff]
    %v330 = vld [vmem:[#allocation6 + $0xb8] sm:$0xff]
    %v331 = vld [vmem:[#allocation6 + $0xc0] sm:$0xff]
    %v332 = vld [vmem:[#allocation6 + $0xc8] sm:$0xff]
    %v333 = vld [vmem:[#allocation6 + $0xd0] sm:$0xff]
    %v334 = vld [vmem:[#allocation6 + $0xd8] sm:$0xff]
    %v335 = vld [vmem:[#allocation6 + $0xe0] sm:$0xff]
    %v336 = vld [vmem:[#allocation6 + $0xe8] sm:$0xff]
    %v337 = vld [vmem:[#allocation6 + $0xf0] sm:$0xff]
    %v338 = vld [vmem:[#allocation6 + $0xf8] sm:$0xff]
    %v339 = vld [vmem:[%s4] sm:$0x1]
    %v341 = vperm.slane %v339, 0
    %343 = vmatpush.msra.mxu0 %v322
    %344 = vmatpush.msra.mxu0 %v321
    %345 = vmatpush.msra.mxu0 %v320
    %346 = vmatpush.msra.mxu0 %v319
    %347 = vmatpush.msra.mxu0 %v318
    %348 = vmatpush.msra.mxu0 %v317
    %349 = vmatpush.msra.mxu0 %v316
    %350 = vmatpush.msra.mxu0 %v315
    %351 = vmatpush.msra.mxu0 %v314
    %352 = vmatpush.msra.mxu0 %v313
    %353 = vmatpush.msra.mxu0 %v312
    %354 = vmatpush.msra.mxu0 %v311
    %355 = vmatpush.msra.mxu0 %v310
    %356 = vmatpush.msra.mxu0 %v309
    %357 = vmatpush.msra.mxu0 %v308
    %358 = vmatpush.msra.mxu0 %v307
    %359 = vmatmul.f32.gmra.mxu0 %v305
    %v360 = vpop.f32.mrf.mxu0
    %v361 = vadd.f32 %v341, %v360
    %362 = vdwg.mxu0
    %363 = vmatpush.msra.mxu0 %v338
    %364 = vmatpush.msra.mxu0 %v337
    %365 = vmatpush.msra.mxu0 %v336
    %366 = vmatpush.msra.mxu0 %v335
    %367 = vmatpush.msra.mxu0 %v334
    %368 = vmatpush.msra.mxu0 %v333
    %369 = vmatpush.msra.mxu0 %v332
    %370 = vmatpush.msra.mxu0 %v331
    %371 = vmatpush.msra.mxu0 %v330
    %372 = vmatpush.msra.mxu0 %v329
    %373 = vmatpush.msra.mxu0 %v328
    %374 = vmatpush.msra.mxu0 %v327
    %375 = vmatpush.msra.mxu0 %v326
    %376 = vmatpush.msra.mxu0 %v325
    %377 = vmatpush.msra.mxu0 %v324
    %378 = vmatpush.msra.mxu0 %v323
    %379 = vmatmul.f32.gmra.mxu0 %v306
    %v380 = vpop.f32.mrf.mxu0
    %v381 = vadd.f32 %v361, %v380
    %382 = vdwg.mxu0
    %v383 = vmax.f32 %v381, 0.0
    %v384 = vld [vmem:[%s5] sm:$0xff]
    %v385 = vld [vmem:[%s5 + $0x8] sm:$0xff]
    %v386 = vld [vmem:[%s5 + $0x10] sm:$0xff]
    %v387 = vld [vmem:[%s5 + $0x18] sm:$0xff]
    %v388 = vld [vmem:[%s5 + $0x20] sm:$0xff]
    %v389 = vld [vmem:[%s5 + $0x28] sm:$0xff]
    %v390 = vld [vmem:[%s5 + $0x30] sm:$0xff]
    %v391 = vld [vmem:[%s5 + $0x38] sm:$0xff]
    %v392 = vld [vmem:[%s5 + $0x40] sm:$0xff]
    %v393 = vld [vmem:[%s5 + $0x48] sm:$0xff]
    %v394 = vld [vmem:[%s5 + $0x50] sm:$0xff]
    %v395 = vld [vmem:[%s5 + $0x58] sm:$0xff]
    %v396 = vld [vmem:[%s5 + $0x60] sm:$0xff]
    %v397 = vld [vmem:[%s5 + $0x68] sm:$0xff]
    %v398 = vld [vmem:[%s5 + $0x70] sm:$0xff]
    %v399 = vld [vmem:[%s5 + $0x78] sm:$0xff]
    %v400 = vld [vmem:[%s6] sm:$0x1]
    %v402 = vperm.slane %v400, 0
    %404 = vmatpush.msra.mxu0 %v399
    %405 = vmatpush.msra.mxu0 %v398
    %406 = vmatpush.msra.mxu0 %v397
    %407 = vmatpush.msra.mxu0 %v396
    %408 = vmatpush.msra.mxu0 %v395
    %409 = vmatpush.msra.mxu0 %v394
    %410 = vmatpush.msra.mxu0 %v393
    %411 = vmatpush.msra.mxu0 %v392
    %412 = vmatpush.msra.mxu0 %v391
    %413 = vmatpush.msra.mxu0 %v390
    %414 = vmatpush.msra.mxu0 %v389
    %415 = vmatpush.msra.mxu0 %v388
    %416 = vmatpush.msra.mxu0 %v387
    %417 = vmatpush.msra.mxu0 %v386
    %418 = vmatpush.msra.mxu0 %v385
    %419 = vmatpush.msra.mxu0 %v384
    %420 = vmatmul.f32.gmra.mxu0 %v383
    %v421 = vpop.f32.mrf.mxu0
    %v422 = vadd.f32 %v402, %v421
    %423 = vdwg.mxu0
    %v424 = vmax.f32 %v422, 0.0
    %v425 = vld [vmem:[%s7] sm:$0xff]
    %v426 = vld [vmem:[%s7 + $0x8] sm:$0xff]
    %v427 = vld [vmem:[%s7 + $0x10] sm:$0xff]
    %v428 = vld [vmem:[%s7 + $0x18] sm:$0xff]
    %v429 = vld [vmem:[%s7 + $0x20] sm:$0xff]
    %v430 = vld [vmem:[%s7 + $0x28] sm:$0xff]
    %v431 = vld [vmem:[%s7 + $0x30] sm:$0xff]
    %v432 = vld [vmem:[%s7 + $0x38] sm:$0xff]
    %v433 = vld [vmem:[%s7 + $0x40] sm:$0xff]
    %v434 = vld [vmem:[%s7 + $0x48] sm:$0xff]
    %v435 = vld [vmem:[%s7 + $0x50] sm:$0xff]
    %v436 = vld [vmem:[%s7 + $0x58] sm:$0xff]
    %v437 = vld [vmem:[%s7 + $0x60] sm:$0xff]
    %v438 = vld [vmem:[%s7 + $0x68] sm:$0xff]
    %v439 = vld [vmem:[%s7 + $0x70] sm:$0xff]
    %v440 = vld [vmem:[%s7 + $0x78] sm:$0xff]
    %v441 = vld [vmem:[%s8] sm:$0x1]
    %v443 = vperm.slane %v441, 0
    %445 = vmatpush.msra.mxu0 %v440
    %446 = vmatpush.msra.mxu0 %v439
    %447 = vmatpush.msra.mxu0 %v438
    %448 = vmatpush.msra.mxu0 %v437
    %449 = vmatpush.msra.mxu0 %v436
    %450 = vmatpush.msra.mxu0 %v435
    %451 = vmatpush.msra.mxu0 %v434
    %452 = vmatpush.msra.mxu0 %v433
    %453 = vmatpush.msra.mxu0 %v432
    %454 = vmatpush.msra.mxu0 %v431
    %455 = vmatpush.msra.mxu0 %v430
    %456 = vmatpush.msra.mxu0 %v429
    %457 = vmatpush.msra.mxu0 %v428
    %458 = vmatpush.msra.mxu0 %v427
    %459 = vmatpush.msra.mxu0 %v426
    %460 = vmatpush.msra.mxu0 %v425
    %461 = vmatmul.f32.gmra.mxu0 %v424
    %v462 = vpop.f32.mrf.mxu0
    %v463 = vadd.f32 %v443, %v462
    %464 = vdwg.mxu0
    %vm465 = vcmask 23552
    %466 = vst.msk [vmem:[%s9] sm:$0xff] %vm465, %v463
    // Predicated region
    $region50: #{tpu_custom_call.1} parent=1 // pred_check
      _
    $region51: #{tpu_custom_call.1} parent=1 // pred_check_branch
      %468 = sbr.rel (0) target = $region53
    $region52: #{tpu_custom_call.1} parent=1 // pred_region
      _
    $region53: #{tpu_custom_call.1} parent=1 // pred_fallthru
      _
    // Predicated region
    $region54: #{tpu_custom_call.1} parent=1 // pred_check
      _
    $region55: #{tpu_custom_call.1} parent=1 // pred_check_branch
      %470 = sbr.rel (0) target = $region57
    $region56: #{tpu_custom_call.1} parent=1 // pred_region
      _
    $region57: #{tpu_custom_call.1} parent=1 // pred_fallthru
      _
    %471 = vsyncpa [#allocation3], 1
    %472 = vsyncpa [#allocation5], 1

// kernel: tpu_custom_call.1
$region0: #{tpu_custom_call.1}
  #allocation0 [shape = 'u32[]', space=smem, size = 0x4, offset = 0x4, fixed_abs, tag = 'smem constant byte address 0x4 - core index']
  #allocation1 [shape = 'u32[72,128]{1,0:T(1,128)}', space=vmem, size = 0x9000, scoped, tag = 'internal scratch']
  %s0 = inlined_call_operand.hbm [shape: f32[8,350], index: 0, kind: input, shape index: {}]
  %s1 = inlined_call_operand.hbm [shape: f32[350,256], index: 1, kind: input, shape index: {}]
  %s2 = inlined_call_operand.vmem [shape: f32[1,256], index: 2, kind: input, shape index: {}]
  %s3 = inlined_call_operand.hbm [shape: f32[256,128], index: 3, kind: input, shape index: {}]
  %s4 = inlined_call_operand.vmem [shape: f32[1,128], index: 4, kind: input, shape index: {}]
  %s5 = inlined_call_operand.vmem [shape: f32[128,128], index: 5, kind: input, shape index: {}]
  %s6 = inlined_call_operand.vmem [shape: f32[1,128], index: 6, kind: input, shape index: {}]
  %s7 = inlined_call_operand.vmem [shape: f32[128,3], index: 7, kind: input, shape index: {}]
  %s8 = inlined_call_operand.vmem [shape: f32[1,3], index: 8, kind: input, shape index: {}]
  %s9 = inlined_call_operand.vmem [shape: f32[8,3], index: 9, kind: output, shape index: {}]
  %s10 = sld [smem:[#allocation0]]
  $region58: #{tpu_custom_call.1} parent=0
    _
  %s12 = ssub.s32 1, %s10
  %s13 = scalar_select 0, %s12, %s10
  $region1: #{tpu_custom_call.1} parent=0
    #allocation2 [shape = 'u8[12288]{0}', space=vmem, size = 0x3000, scoped, tag = 'input window, operand 0, single buffered']
    #allocation3 [shape = 's32[1]{0}', space=sflag, size = 0x4, scoped, tag = 'scoped memory for tpu_custom_call.1']
    #allocation4 [shape = 'u8[360448]{0}', space=vmem, size = 0x58000, scoped, tag = 'input window, operand 1, single buffered']
    #allocation5 [shape = 's32[1]{0}', space=sflag, size = 0x4, scoped, tag = 'scoped memory for tpu_custom_call.1']
    #allocation6 [shape = 'u8[131072]{0}', space=vmem, size = 0x20000, scoped, tag = 'input window, operand 3, single buffered']
    %14 = vsyncpa [#allocation3], 0
    %15 = vsyncpa [#allocation5], 0
    // Predicated region
    $region2: #{tpu_custom_call.1} parent=1 // pred_check
      _
    $region3: #{tpu_custom_call.1} parent=1 // pred_check_branch
      %17 = sbr.rel (0) target = $region5
    $region4: #{tpu_custom_call.1} parent=1 // pred_region
      %19 = vsyncadd [#allocation3], 0
      %s21 = sshll.u32 %s0, 4
      %s22 = int_to_ptr.hbm [resolvable:$true] %s21
      %s23 = sshll.u32 [#allocation2], 4
      %s24 = int_to_ptr.vmem [resolvable:$true] %s23
      %26 = dma.hbm_to_vmem [thread:$0]  %s22, 384, %s24, [#allocation3]
    $region5: #{tpu_custom_call.1} parent=1 // pred_fallthru
      _
    // Predicated region
    $region6: #{tpu_custom_call.1} parent=1 // pred_check
      _
    $region7: #{tpu_custom_call.1} parent=1 // pred_check_branch
      %28 = sbr.rel (0) target = $region9
    $region8: #{tpu_custom_call.1} parent=1 // pred_region
      %30 = vsyncadd [#allocation5], 0
      %s31 = sshll.u32 %s1, 4
      %s32 = int_to_ptr.hbm [resolvable:$true] %s31
      %s33 = sshll.u32 [#allocation4], 4
      %s34 = int_to_ptr.vmem [resolvable:$true] %s33
      %39 = dma.hbm_to_vmem [thread:$0]  %s32, 11264, %s34, [#allocation5], 256, 256, 16
    $region9: #{tpu_custom_call.1} parent=1 // pred_fallthru
      _
    // Predicated region
    $region10: #{tpu_custom_call.1} parent=1 // pred_check
      _
    $region11: #{tpu_custom_call.1} parent=1 // pred_check_branch
      %41 = sbr.rel (0) target = $region13
    $region12: #{tpu_custom_call.1} parent=1 // pred_region
      _
    $region13: #{tpu_custom_call.1} parent=1 // pred_fallthru
      _
    // Predicated region
    $region14: #{tpu_custom_call.1} parent=1 // pred_check
      _
    $region15: #{tpu_custom_call.1} parent=1 // pred_check_branch
      %43 = sbr.rel (0) target = $region17
    $region16: #{tpu_custom_call.1} parent=1 // pred_region
      %45 = vsyncadd [#allocation5], 0
      %s46 = sshll.u32 %s3, 4
      %s47 = int_to_ptr.hbm [resolvable:$true] %s46
      %s48 = sshll.u32 [#allocation6], 4
      %s49 = int_to_ptr.vmem [resolvable:$true] %s48
      %54 = dma.hbm_to_vmem [thread:$0]  %s47, 4096, %s49, [#allocation5], 128, 128, 8
    $region17: #{tpu_custom_call.1} parent=1 // pred_fallthru
      _
    // Predicated region
    $region18: #{tpu_custom_call.1} parent=1 // pred_check
      _
    $region19: #{tpu_custom_call.1} parent=1 // pred_check_branch
      %56 = sbr.rel (0) target = $region21
    $region20: #{tpu_custom_call.1} parent=1 // pred_region
      _
    $region21: #{tpu_custom_call.1} parent=1 // pred_fallthru
      _
    // Predicated region
    $region22: #{tpu_custom_call.1} parent=1 // pred_check
      _
    $region23: #{tpu_custom_call.1} parent=1 // pred_check_branch
      %58 = sbr.rel (0) target = $region25
    $region24: #{tpu_custom_call.1} parent=1 // pred_region
      _
    $region25: #{tpu_custom_call.1} parent=1 // pred_fallthru
      _
    // Predicated region
    $region26: #{tpu_custom_call.1} parent=1 // pred_check
      _
    $region27: #{tpu_custom_call.1} parent=1 // pred_check_branch
      %60 = sbr.rel (0) target = $region29
    $region28: #{tpu_custom_call.1} parent=1 // pred_region
      _
    $region29: #{tpu_custom_call.1} parent=1 // pred_fallthru
      _
    // Predicated region
    $region30: #{tpu_custom_call.1} parent=1 // pred_check
      _
    $region31: #{tpu_custom_call.1} parent=1 // pred_check_branch
      %62 = sbr.rel (0) target = $region33
    $region32: #{tpu_custom_call.1} parent=1 // pred_region
      _
    $region33: #{tpu_custom_call.1} parent=1 // pred_fallthru
      _
    // Predicated region
    $region34: #{tpu_custom_call.1} parent=1 // pred_check
      _
    $region35: #{tpu_custom_call.1} parent=1 // pred_check_branch
      %64 = sbr.rel (0) target = $region37
    $region36: #{tpu_custom_call.1} parent=1 // pred_region
      _
    $region37: #{tpu_custom_call.1} parent=1 // pred_fallthru
      _
    // Predicated region
    $region38: #{tpu_custom_call.1} parent=1 // pred_check
      _
    $region39: #{tpu_custom_call.1} parent=1 // pred_check_branch
      %66 = sbr.rel (0) target = $region41
    $region40: #{tpu_custom_call.1} parent=1 // pred_region
      %68 = dma.done [#allocation3], 384
    $region41: #{tpu_custom_call.1} parent=1 // pred_fallthru
      _
    // Predicated region
    $region42: #{tpu_custom_call.1} parent=1 // pred_check
      _
    $region43: #{tpu_custom_call.1} parent=1 // pred_check_branch
      %70 = sbr.rel (0) target = $region45
    $region44: #{tpu_custom_call.1} parent=1 // pred_region
      %72 = dma.done [#allocation5], 11264
    $region45: #{tpu_custom_call.1} parent=1 // pred_fallthru
      _
    // Predicated region
    $region46: #{tpu_custom_call.1} parent=1 // pred_check
      _
    $region47: #{tpu_custom_call.1} parent=1 // pred_check_branch
      %74 = sbr.rel (0) target = $region49
    $region48: #{tpu_custom_call.1} parent=1 // pred_region
      %76 = dma.done [#allocation5], 4096
    $region49: #{tpu_custom_call.1} parent=1 // pred_fallthru
      _
    %v77 = vld [vmem:[#allocation2] sm:$0xff]
    %v78 = vld [vmem:[#allocation2 + $0x8] sm:$0xff]
    %v79 = vld [vmem:[#allocation2 + $0x10] sm:$0xff]
    %v80 = vld [vmem:[#allocation4] sm:$0xff]
    %v81 = vld [vmem:[#allocation4 + $0x8] sm:$0xff]
    %v82 = vld [vmem:[#allocation4 + $0x10] sm:$0xff]
    %v83 = vld [vmem:[#allocation4 + $0x18] sm:$0xff]
    %v84 = vld [vmem:[#allocation4 + $0x20] sm:$0xff]
    %v85 = vld [vmem:[#allocation4 + $0x28] sm:$0xff]
    %v86 = vld [vmem:[#allocation4 + $0x30] sm:$0xff]
    %v87 = vld [vmem:[#allocation4 + $0x38] sm:$0xff]
    %v88 = vld [vmem:[#allocation4 + $0x40] sm:$0xff]
    %v89 = vld [vmem:[#allocation4 + $0x48] sm:$0xff]
    %v90 = vld [vmem:[#allocation4 + $0x50] sm:$0xff]
    %v91 = vld [vmem:[#allocation4 + $0x58] sm:$0xff]
    %v92 = vld [vmem:[#allocation4 + $0x60] sm:$0xff]
    %v93 = vld [vmem:[#allocation4 + $0x68] sm:$0xff]
    %v94 = vld [vmem:[#allocation4 + $0x70] sm:$0xff]
    %v95 = vld [vmem:[#allocation4 + $0x78] sm:$0xff]
    %v96 = vld [vmem:[#allocation4 + $0x80] sm:$0xff]
    %v97 = vld [vmem:[#allocation4 + $0x88] sm:$0xff]
    %v98 = vld [vmem:[#allocation4 + $0x90] sm:$0xff]
    %v99 = vld [vmem:[#allocation4 + $0x98] sm:$0xff]
    %v100 = vld [vmem:[#allocation4 + $0xa0] sm:$0xff]
    %v101 = vld [vmem:[#allocation4 + $0xa8] sm:$0xff]
    %v102 = vld [vmem:[#allocation4 + $0xb0] sm:$0xff]
    %v103 = vld [vmem:[#allocation4 + $0xb8] sm:$0xff]
    %v104 = vld [vmem:[#allocation4 + $0xc0] sm:$0xff]
    %v105 = vld [vmem:[#allocation4 + $0xc8] sm:$0xff]
    %v106 = vld [vmem:[#allocation4 + $0xd0] sm:$0xff]
    %v107 = vld [vmem:[#allocation4 + $0xd8] sm:$0xff]
    %v108 = vld [vmem:[#allocation4 + $0xe0] sm:$0xff]
    %v109 = vld [vmem:[#allocation4 + $0xe8] sm:$0xff]
    %v110 = vld [vmem:[#allocation4 + $0xf0] sm:$0xff]
    %v111 = vld [vmem:[#allocation4 + $0xf8] sm:$0xff]
    %v112 = vld [vmem:[#allocation4 + $0x100] sm:$0xff]
    %v113 = vld [vmem:[#allocation4 + $0x108] sm:$0xff]
    %v114 = vld [vmem:[#allocation4 + $0x110] sm:$0xff]
    %v115 = vld [vmem:[#allocation4 + $0x118] sm:$0xff]
    %v116 = vld [vmem:[#allocation4 + $0x120] sm:$0xff]
    %v117 = vld [vmem:[#allocation4 + $0x128] sm:$0xff]
    %v118 = vld [vmem:[#allocation4 + $0x130] sm:$0xff]
    %v119 = vld [vmem:[#allocation4 + $0x138] sm:$0xff]
    %v120 = vld [vmem:[#allocation4 + $0x140] sm:$0xff]
    %v121 = vld [vmem:[#allocation4 + $0x148] sm:$0xff]
    %v122 = vld [vmem:[#allocation4 + $0x150] sm:$0xff]
    %v123 = vld [vmem:[#allocation4 + $0x158] sm:$0xff]
    %v124 = vld [vmem:[#allocation4 + $0x160] sm:$0xff]
    %v125 = vld [vmem:[#allocation4 + $0x168] sm:$0xff]
    %v126 = vld [vmem:[#allocation4 + $0x170] sm:$0xff]
    %v127 = vld [vmem:[#allocation4 + $0x178] sm:$0xff]
    %v128 = vld [vmem:[#allocation4 + $0x180] sm:$0xff]
    %v129 = vld [vmem:[#allocation4 + $0x188] sm:$0xff]
    %v130 = vld [vmem:[#allocation4 + $0x190] sm:$0xff]
    %v131 = vld [vmem:[#allocation4 + $0x198] sm:$0xff]
    %v132 = vld [vmem:[#allocation4 + $0x1a0] sm:$0xff]
    %v133 = vld [vmem:[#allocation4 + $0x1a8] sm:$0xff]
    %v134 = vld [vmem:[#allocation4 + $0x1b0] sm:$0xff]
    %v135 = vld [vmem:[#allocation4 + $0x1b8] sm:$0xff]
    %v136 = vld [vmem:[#allocation4 + $0x1c0] sm:$0xff]
    %v137 = vld [vmem:[#allocation4 + $0x1c8] sm:$0xff]
    %v138 = vld [vmem:[#allocation4 + $0x1d0] sm:$0xff]
    %v139 = vld [vmem:[#allocation4 + $0x1d8] sm:$0xff]
    %v140 = vld [vmem:[#allocation4 + $0x1e0] sm:$0xff]
    %v141 = vld [vmem:[#allocation4 + $0x1e8] sm:$0xff]
    %v142 = vld [vmem:[#allocation4 + $0x1f0] sm:$0xff]
    %v143 = vld [vmem:[#allocation4 + $0x1f8] sm:$0xff]
    %v144 = vld [vmem:[#allocation4 + $0x200] sm:$0xff]
    %v145 = vld [vmem:[#allocation4 + $0x208] sm:$0xff]
    %v146 = vld [vmem:[#allocation4 + $0x210] sm:$0xff]
    %v147 = vld [vmem:[#allocation4 + $0x218] sm:$0xff]
    %v148 = vld [vmem:[#allocation4 + $0x220] sm:$0xff]
    %v149 = vld [vmem:[#allocation4 + $0x228] sm:$0xff]
    %v150 = vld [vmem:[#allocation4 + $0x230] sm:$0xff]
    %v151 = vld [vmem:[#allocation4 + $0x238] sm:$0xff]
    %v152 = vld [vmem:[#allocation4 + $0x240] sm:$0xff]
    %v153 = vld [vmem:[#allocation4 + $0x248] sm:$0xff]
    %v154 = vld [vmem:[#allocation4 + $0x250] sm:$0xff]
    %v155 = vld [vmem:[#allocation4 + $0x258] sm:$0xff]
    %v156 = vld [vmem:[#allocation4 + $0x260] sm:$0xff]
    %v157 = vld [vmem:[#allocation4 + $0x268] sm:$0xff]
    %v158 = vld [vmem:[#allocation4 + $0x270] sm:$0xff]
    %v159 = vld [vmem:[#allocation4 + $0x278] sm:$0xff]
    %v160 = vld [vmem:[#allocation4 + $0x280] sm:$0xff]
    %v161 = vld [vmem:[#allocation4 + $0x288] sm:$0xff]
    %v162 = vld [vmem:[#allocation4 + $0x290] sm:$0xff]
    %v163 = vld [vmem:[#allocation4 + $0x298] sm:$0xff]
    %v164 = vld [vmem:[#allocation4 + $0x2a0] sm:$0xff]
    %v165 = vld [vmem:[#allocation4 + $0x2a8] sm:$0xff]
    %v166 = vld [vmem:[#allocation4 + $0x2b0] sm:$0x3f]
    %v167 = vld [vmem:[#allocation4 + $0x2b8] sm:$0x3f]
    %v168 = vld [vmem:[%s2] sm:$0x3]
    %v170 = vperm.slane %v168, 0
    %v171 = vperm.slane %v168, 1
    %vm174 = vcmask 769024
    %v176 = vsel %vm174, %v79, 0
    %vm178 = vcmask 1045504
    %v180 = vsel %vm178, %v166, 0
    %v183 = vsel %vm178, %v167, 0
    %185 = vmatpush.msra.mxu0 %v110
    %186 = vmatpush.msra.mxu0 %v108
    %187 = vmatpush.msra.mxu0 %v106
    %188 = vmatpush.msra.mxu0 %v104
    %189 = vmatpush.msra.mxu0 %v102
    %190 = vmatpush.msra.mxu0 %v100
    %191 = vmatpush.msra.mxu0 %v98
    %192 = vmatpush.msra.mxu0 %v96
    %193 = vmatpush.msra.mxu0 %v94
    %194 = vmatpush.msra.mxu0 %v92
    %195 = vmatpush.msra.mxu0 %v90
    %196 = vmatpush.msra.mxu0 %v88
    %197 = vmatpush.msra.mxu0 %v86
    %198 = vmatpush.msra.mxu0 %v84
    %199 = vmatpush.msra.mxu0 %v82
    %200 = vmatpush.msra.mxu0 %v80
    %201 = vmatmul.f32.gmra.mxu0 %v77
    %v202 = vpop.f32.mrf.mxu0
    %v203 = vadd.f32 %v170, %v202
    %204 = vdwg.mxu0
    %205 = vmatpush.msra.mxu0 %v142
    %206 = vmatpush.msra.mxu0 %v140
    %207 = vmatpush.msra.mxu0 %v138
    %208 = vmatpush.msra.mxu0 %v136
    %209 = vmatpush.msra.mxu0 %v134
    %210 = vmatpush.msra.mxu0 %v132
    %211 = vmatpush.msra.mxu0 %v130
    %212 = vmatpush.msra.mxu0 %v128
    %213 = vmatpush.msra.mxu0 %v126
    %214 = vmatpush.msra.mxu0 %v124
    %215 = vmatpush.msra.mxu0 %v122
    %216 = vmatpush.msra.mxu0 %v120
    %217 = vmatpush.msra.mxu0 %v118
    %218 = vmatpush.msra.mxu0 %v116
    %219 = vmatpush.msra.mxu0 %v114
    %220 = vmatpush.msra.mxu0 %v112
    %221 = vmatmul.f32.gmra.mxu0 %v78
    %v222 = vpop.f32.mrf.mxu0
    %v223 = vadd.f32 %v203, %v222
    %224 = vdwg.mxu0
    %225 = vmatpush.msra.mxu0 0.0
    %226 = vmatpush.msra.mxu0 0.0
    %227 = vmatpush.msra.mxu0 0.0
    %228 = vmatpush.msra.mxu0 0.0
    %229 = vmatpush.msra.mxu0 %v180
    %230 = vmatpush.msra.mxu0 %v164
    %231 = vmatpush.msra.mxu0 %v162
    %232 = vmatpush.msra.mxu0 %v160
    %233 = vmatpush.msra.mxu0 %v158
    %234 = vmatpush.msra.mxu0 %v156
    %235 = vmatpush.msra.mxu0 %v154
    %236 = vmatpush.msra.mxu0 %v152
    %237 = vmatpush.msra.mxu0 %v150
    %238 = vmatpush.msra.mxu0 %v148
    %239 = vmatpush.msra.mxu0 %v146
    %240 = vmatpush.msra.mxu0 %v144
    %241 = vmatmul.f32.gmra.mxu0 %v176
    %v242 = vpop.f32.mrf.mxu0
    %v243 = vadd.f32 %v223, %v242
    %244 = vdwg.mxu0
    %245 = vmatpush.msra.mxu0 %v111
    %246 = vmatpush.msra.mxu0 %v109
    %247 = vmatpush.msra.mxu0 %v107
    %248 = vmatpush.msra.mxu0 %v105
    %249 = vmatpush.msra.mxu0 %v103
    %250 = vmatpush.msra.mxu0 %v101
    %251 = vmatpush.msra.mxu0 %v99
    %252 = vmatpush.msra.mxu0 %v97
    %253 = vmatpush.msra.mxu0 %v95
    %254 = vmatpush.msra.mxu0 %v93
    %255 = vmatpush.msra.mxu0 %v91
    %256 = vmatpush.msra.mxu0 %v89
    %257 = vmatpush.msra.mxu0 %v87
    %258 = vmatpush.msra.mxu0 %v85
    %259 = vmatpush.msra.mxu0 %v83
    %260 = vmatpush.msra.mxu0 %v81
    %261 = vmatmul.f32.gmra.mxu0 %v77
    %v262 = vpop.f32.mrf.mxu0
    %v263 = vadd.f32 %v171, %v262
    %264 = vdwg.mxu0
    %265 = vmatpush.msra.mxu0 %v143
    %266 = vmatpush.msra.mxu0 %v141
    %267 = vmatpush.msra.mxu0 %v139
    %268 = vmatpush.msra.mxu0 %v137
    %269 = vmatpush.msra.mxu0 %v135
    %270 = vmatpush.msra.mxu0 %v133
    %271 = vmatpush.msra.mxu0 %v131
    %272 = vmatpush.msra.mxu0 %v129
    %273 = vmatpush.msra.mxu0 %v127
    %274 = vmatpush.msra.mxu0 %v125
    %275 = vmatpush.msra.mxu0 %v123
    %276 = vmatpush.msra.mxu0 %v121
    %277 = vmatpush.msra.mxu0 %v119
    %278 = vmatpush.msra.mxu0 %v117
    %279 = vmatpush.msra.mxu0 %v115
    %280 = vmatpush.msra.mxu0 %v113
    %281 = vmatmul.f32.gmra.mxu0 %v78
    %v282 = vpop.f32.mrf.mxu0
    %v283 = vadd.f32 %v263, %v282
    %284 = vdwg.mxu0
    %285 = vmatpush.msra.mxu0 0.0
    %286 = vmatpush.msra.mxu0 0.0
    %287 = vmatpush.msra.mxu0 0.0
    %288 = vmatpush.msra.mxu0 0.0
    %289 = vmatpush.msra.mxu0 %v183
    %290 = vmatpush.msra.mxu0 %v165
    %291 = vmatpush.msra.mxu0 %v163
    %292 = vmatpush.msra.mxu0 %v161
    %293 = vmatpush.msra.mxu0 %v159
    %294 = vmatpush.msra.mxu0 %v157
    %295 = vmatpush.msra.mxu0 %v155
    %296 = vmatpush.msra.mxu0 %v153
    %297 = vmatpush.msra.mxu0 %v151
    %298 = vmatpush.msra.mxu0 %v149
    %299 = vmatpush.msra.mxu0 %v147
    %300 = vmatpush.msra.mxu0 %v145
    %301 = vmatmul.f32.gmra.mxu0 %v176
    %v302 = vpop.f32.mrf.mxu0
    %v303 = vadd.f32 %v283, %v302
    %304 = vdwg.mxu0
    %v305 = vmax.f32 %v243, 0.0
    %v306 = vmax.f32 %v303, 0.0
    %v307 = vld [vmem:[#allocation6] sm:$0xff]
    %v308 = vld [vmem:[#allocation6 + $0x8] sm:$0xff]
    %v309 = vld [vmem:[#allocation6 + $0x10] sm:$0xff]
    %v310 = vld [vmem:[#allocation6 + $0x18] sm:$0xff]
    %v311 = vld [vmem:[#allocation6 + $0x20] sm:$0xff]
    %v312 = vld [vmem:[#allocation6 + $0x28] sm:$0xff]
    %v313 = vld [vmem:[#allocation6 + $0x30] sm:$0xff]
    %v314 = vld [vmem:[#allocation6 + $0x38] sm:$0xff]
    %v315 = vld [vmem:[#allocation6 + $0x40] sm:$0xff]
    %v316 = vld [vmem:[#allocation6 + $0x48] sm:$0xff]
    %v317 = vld [vmem:[#allocation6 + $0x50] sm:$0xff]
    %v318 = vld [vmem:[#allocation6 + $0x58] sm:$0xff]
    %v319 = vld [vmem:[#allocation6 + $0x60] sm:$0xff]
    %v320 = vld [vmem:[#allocation6 + $0x68] sm:$0xff]
    %v321 = vld [vmem:[#allocation6 + $0x70] sm:$0xff]
    %v322 = vld [vmem:[#allocation6 + $0x78] sm:$0xff]
    %v323 = vld [vmem:[#allocation6 + $0x80] sm:$0xff]
    %v324 = vld [vmem:[#allocation6 + $0x88] sm:$0xff]
    %v325 = vld [vmem:[#allocation6 + $0x90] sm:$0xff]
    %v326 = vld [vmem:[#allocation6 + $0x98] sm:$0xff]
    %v327 = vld [vmem:[#allocation6 + $0xa0] sm:$0xff]
    %v328 = vld [vmem:[#allocation6 + $0xa8] sm:$0xff]
    %v329 = vld [vmem:[#allocation6 + $0xb0] sm:$0xff]
    %v330 = vld [vmem:[#allocation6 + $0xb8] sm:$0xff]
    %v331 = vld [vmem:[#allocation6 + $0xc0] sm:$0xff]
    %v332 = vld [vmem:[#allocation6 + $0xc8] sm:$0xff]
    %v333 = vld [vmem:[#allocation6 + $0xd0] sm:$0xff]
    %v334 = vld [vmem:[#allocation6 + $0xd8] sm:$0xff]
    %v335 = vld [vmem:[#allocation6 + $0xe0] sm:$0xff]
    %v336 = vld [vmem:[#allocation6 + $0xe8] sm:$0xff]
    %v337 = vld [vmem:[#allocation6 + $0xf0] sm:$0xff]
    %v338 = vld [vmem:[#allocation6 + $0xf8] sm:$0xff]
    %v339 = vld [vmem:[%s4] sm:$0x1]
    %v341 = vperm.slane %v339, 0
    %343 = vmatpush.msra.mxu0 %v322
    %344 = vmatpush.msra.mxu0 %v321
    %345 = vmatpush.msra.mxu0 %v320
    %346 = vmatpush.msra.mxu0 %v319
    %347 = vmatpush.msra.mxu0 %v318
    %348 = vmatpush.msra.mxu0 %v317
    %349 = vmatpush.msra.mxu0 %v316
    %350 = vmatpush.msra.mxu0 %v315
    %351 = vmatpush.msra.mxu0 %v314
    %352 = vmatpush.msra.mxu0 %v313
    %353 = vmatpush.msra.mxu0 %v312
    %354 = vmatpush.msra.mxu0 %v311
    %355 = vmatpush.msra.mxu0 %v310
    %356 = vmatpush.msra.mxu0 %v309
    %357 = vmatpush.msra.mxu0 %v308
    %358 = vmatpush.msra.mxu0 %v307
    %359 = vmatmul.f32.gmra.mxu0 %v305
    %v360 = vpop.f32.mrf.mxu0
    %v361 = vadd.f32 %v341, %v360
    %362 = vdwg.mxu0
    %363 = vmatpush.msra.mxu0 %v338
    %364 = vmatpush.msra.mxu0 %v337
    %365 = vmatpush.msra.mxu0 %v336
    %366 = vmatpush.msra.mxu0 %v335
    %367 = vmatpush.msra.mxu0 %v334
    %368 = vmatpush.msra.mxu0 %v333
    %369 = vmatpush.msra.mxu0 %v332
    %370 = vmatpush.msra.mxu0 %v331
    %371 = vmatpush.msra.mxu0 %v330
    %372 = vmatpush.msra.mxu0 %v329
    %373 = vmatpush.msra.mxu0 %v328
    %374 = vmatpush.msra.mxu0 %v327
    %375 = vmatpush.msra.mxu0 %v326
    %376 = vmatpush.msra.mxu0 %v325
    %377 = vmatpush.msra.mxu0 %v324
    %378 = vmatpush.msra.mxu0 %v323
    %379 = vmatmul.f32.gmra.mxu0 %v306
    %v380 = vpop.f32.mrf.mxu0
    %v381 = vadd.f32 %v361, %v380
    %382 = vdwg.mxu0
    %v383 = vmax.f32 %v381, 0.0
    %v384 = vld [vmem:[%s5] sm:$0xff]
    %v385 = vld [vmem:[%s5 + $0x8] sm:$0xff]
    %v386 = vld [vmem:[%s5 + $0x10] sm:$0xff]
    %v387 = vld [vmem:[%s5 + $0x18] sm:$0xff]
    %v388 = vld [vmem:[%s5 + $0x20] sm:$0xff]
    %v389 = vld [vmem:[%s5 + $0x28] sm:$0xff]
    %v390 = vld [vmem:[%s5 + $0x30] sm:$0xff]
    %v391 = vld [vmem:[%s5 + $0x38] sm:$0xff]
    %v392 = vld [vmem:[%s5 + $0x40] sm:$0xff]
    %v393 = vld [vmem:[%s5 + $0x48] sm:$0xff]
    %v394 = vld [vmem:[%s5 + $0x50] sm:$0xff]
    %v395 = vld [vmem:[%s5 + $0x58] sm:$0xff]
    %v396 = vld [vmem:[%s5 + $0x60] sm:$0xff]
    %v397 = vld [vmem:[%s5 + $0x68] sm:$0xff]
    %v398 = vld [vmem:[%s5 + $0x70] sm:$0xff]
    %v399 = vld [vmem:[%s5 + $0x78] sm:$0xff]
    %v400 = vld [vmem:[%s6] sm:$0x1]
    %v402 = vperm.slane %v400, 0
    %404 = vmatpush.msra.mxu0 %v399
    %405 = vmatpush.msra.mxu0 %v398
    %406 = vmatpush.msra.mxu0 %v397
    %407 = vmatpush.msra.mxu0 %v396
    %408 = vmatpush.msra.mxu0 %v395
    %409 = vmatpush.msra.mxu0 %v394
    %410 = vmatpush.msra.mxu0 %v393
    %411 = vmatpush.msra.mxu0 %v392
    %412 = vmatpush.msra.mxu0 %v391
    %413 = vmatpush.msra.mxu0 %v390
    %414 = vmatpush.msra.mxu0 %v389
    %415 = vmatpush.msra.mxu0 %v388
    %416 = vmatpush.msra.mxu0 %v387
    %417 = vmatpush.msra.mxu0 %v386
    %418 = vmatpush.msra.mxu0 %v385
    %419 = vmatpush.msra.mxu0 %v384
    %420 = vmatmul.f32.gmra.mxu0 %v383
    %v421 = vpop.f32.mrf.mxu0
    %v422 = vadd.f32 %v402, %v421
    %423 = vdwg.mxu0
    %v424 = vmax.f32 %v422, 0.0
    %v425 = vld [vmem:[%s7] sm:$0xff]
    %v426 = vld [vmem:[%s7 + $0x8] sm:$0xff]
    %v427 = vld [vmem:[%s7 + $0x10] sm:$0xff]
    %v428 = vld [vmem:[%s7 + $0x18] sm:$0xff]
    %v429 = vld [vmem:[%s7 + $0x20] sm:$0xff]
    %v430 = vld [vmem:[%s7 + $0x28] sm:$0xff]
    %v431 = vld [vmem:[%s7 + $0x30] sm:$0xff]
    %v432 = vld [vmem:[%s7 + $0x38] sm:$0xff]
    %v433 = vld [vmem:[%s7 + $0x40] sm:$0xff]
    %v434 = vld [vmem:[%s7 + $0x48] sm:$0xff]
    %v435 = vld [vmem:[%s7 + $0x50] sm:$0xff]
    %v436 = vld [vmem:[%s7 + $0x58] sm:$0xff]
    %v437 = vld [vmem:[%s7 + $0x60] sm:$0xff]
    %v438 = vld [vmem:[%s7 + $0x68] sm:$0xff]
    %v439 = vld [vmem:[%s7 + $0x70] sm:$0xff]
    %v440 = vld [vmem:[%s7 + $0x78] sm:$0xff]
    %v441 = vld [vmem:[%s8] sm:$0x1]
    %v443 = vperm.slane %v441, 0
    %445 = vmatpush.msra.mxu0 %v440
    %446 = vmatpush.msra.mxu0 %v439
    %447 = vmatpush.msra.mxu0 %v438
    %448 = vmatpush.msra.mxu0 %v437
    %449 = vmatpush.msra.mxu0 %v436
    %450 = vmatpush.msra.mxu0 %v435
    %451 = vmatpush.msra.mxu0 %v434
    %452 = vmatpush.msra.mxu0 %v433
    %453 = vmatpush.msra.mxu0 %v432
    %454 = vmatpush.msra.mxu0 %v431
    %455 = vmatpush.msra.mxu0 %v430
    %456 = vmatpush.msra.mxu0 %v429
    %457 = vmatpush.msra.mxu0 %v428
    %458 = vmatpush.msra.mxu0 %v427
    %459 = vmatpush.msra.mxu0 %v426
    %460 = vmatpush.msra.mxu0 %v425
    %461 = vmatmul.f32.gmra.mxu0 %v424
    %v462 = vpop.f32.mrf.mxu0
    %v463 = vadd.f32 %v443, %v462
    %464 = vdwg.mxu0
    %vm465 = vcmask 23552
    %466 = vst.msk [vmem:[%s9] sm:$0xff] %vm465, %v463
    // Predicated region
    $region50: #{tpu_custom_call.1} parent=1 // pred_check
      _
    $region51: #{tpu_custom_call.1} parent=1 // pred_check_branch
      %468 = sbr.rel (0) target = $region53
    $region52: #{tpu_custom_call.1} parent=1 // pred_region
      _
    $region53: #{tpu_custom_call.1} parent=1 // pred_fallthru
      _
    // Predicated region
    $region54: #{tpu_custom_call.1} parent=1 // pred_check
      _
    $region55: #{tpu_custom_call.1} parent=1 // pred_check_branch
      %470 = sbr.rel (0) target = $region57
    $region56: #{tpu_custom_call.1} parent=1 // pred_region
      _
    $region57: #{tpu_custom_call.1} parent=1 // pred_fallthru
      _
    %471 = vsyncpa [#allocation3], 1
    %472 = vsyncpa [#allocation5], 1

</llo_original>
